<compile_context>
chip_gen: v6e
topology: v6e:2x2x1
jax: 0.10.0
libtpu: 0.0.40
codegen_flags: <defaults>
</compile_context>

<pallas_src>
import jax
import jax.numpy as jnp
from jax.experimental import pallas as pl
from jax.experimental.pallas import tpu as pltpu

_LANE = 128


def _round_up(n: int, m: int) -> int:
    return ((n + m - 1) // m) * m


def _cdiv(a: int, b: int) -> int:
    return (a + b - 1) // b


def _act_dtype_for_device():
    """bf16 activation path on v6e/v7x (bf16 VPU/EUP); f32 on v5e and older."""
    try:
        kind = jax.devices()[0].device_kind.lower()
    except Exception:
        return jnp.float32
    if ("v6" in kind) or ("v7" in kind):
        return jnp.bfloat16
    return jnp.float32


def _physical_vmem_bytes() -> int:
    try:
        return int(pltpu.get_tpu_info().vmem_capacity_bytes)
    except Exception:
        return 64 * 1024 * 1024  # conservative (v7x per-TC VMEM)


def _make_fcnet_kernel(n_linear: int, act_dtype):
    """Kernel closure over the (static) number of linear layers."""

    def kernel(*refs):
        # refs = (x_ref, w0, b0, w1, b1, ..., o_ref)
        x_ref = refs[0]
        o_ref = refs[-1]
        h = x_ref[...]
        for i in range(n_linear):
            w_ref = refs[1 + 2 * i]   # bf16 (fan_in[_p], fan_out[_p]), VMEM-resident
            b_ref = refs[2 + 2 * i]   # f32  (1, fan_out[_p])
            # bf16 operands -> full-rate MXU; f32 accumulation; f32 bias add.
            z = jnp.dot(h.astype(jnp.bfloat16), w_ref[...],
                        preferred_element_type=jnp.float32)
            z = (z + b_ref[...]).astype(act_dtype)
            # sigmoid(x) = 0.5*tanh(0.5*x) + 0.5 : tanh runs on the EUP slot,
            # avoiding the exp-then-divide VALU chain. bf16 on v6e/v7x halves
            # EUP/VALU work; f32 on v5e (no bf16 VPU/EUP).
            h = 0.5 * jnp.tanh(0.5 * z) + 0.5
        o_ref[...] = h.astype(o_ref.dtype)

    return kernel


def prepare_fcnet_params(weights, biases):
    """One-time pad + bf16 cast of params (hoisted out of the per-call path).

    Hidden feature dims are zero-padded to multiples of 128 lanes; the input
    dim (K of layer 0) and the output dim (N of the last layer) are kept exact
    so the kernel can read x and write the output unpadded.
    Padded lanes are numerically inert: sigmoid(0)=0.5 outputs multiply
    zero-padded weight rows of the next layer.
    """
    n_linear = len(weights)
    assert len(biases) == n_linear
    dims = [weights[0].shape[0]] + [w.shape[1] for w in weights]
    dims_p = ([dims[0]]
              + [_round_up(d, _LANE) for d in dims[1:-1]]
              + [dims[-1]])
    params = []
    for li, (w, b) in enumerate(zip(weights, biases)):
        fi, fo = w.shape
        fip, fop = dims_p[li], dims_p[li + 1]
        w_p = (jnp.zeros((fip, fop), jnp.float32)
               .at[:fi, :fo].set(w).astype(jnp.bfloat16))
        b_p = jnp.zeros((1, fop), jnp.float32).at[0, :fo].set(b)
        params.append((w_p, b_p))
    return params


def _choose_batch_tiling(B: int, batch_tile: int):
    """Pick (tile, padded_B, steps). >=2 steps when B>=16 so v7x's 2 TCs both work."""
    if B < 8:
        return B, B, 1
    steps = _cdiv(B, min(batch_tile, B))
    if B >= 16:
        steps = max(steps, 2)
    bt = _round_up(_cdiv(B, steps), 8)
    return bt, steps * bt, steps


def fcnet_pallas(x, params, *, batch_tile=512):
    """Run the _FCNet forward pass as one Pallas kernel.

    x:       (B, indim) float32
    params:  output of prepare_fcnet_params() — list of (w_bf16, b_f32) pairs.
    """
    n_linear = len(params)
    B, indim = x.shape
    assert params[0][0].shape[0] == indim
    outdim = params[-1][0].shape[1]

    act_dtype = _act_dtype_for_device()

    bt, B_p, steps = _choose_batch_tiling(B, batch_tile)
    if B_p != B:
        # Ragged batch: pad rows (only case where we touch x in HBM).
        x_in = jnp.zeros((B_p, indim), x.dtype).at[:B, :].set(x)
    else:
        x_in = x

    param_arrays = []
    param_specs = []
    param_bytes = 0
    for w_p, b_p in params:
        param_arrays.extend([w_p, b_p])
        # Grid-invariant params: single resident VMEM copy (no double buffering,
        # no per-grid-step DMA descriptors).
        param_specs.append(pl.BlockSpec(memory_space=pltpu.MemorySpace.VMEM))
        param_specs.append(pl.BlockSpec(memory_space=pltpu.MemorySpace.VMEM))
        param_bytes += w_p.size * w_p.dtype.itemsize + b_p.size * b_p.dtype.itemsize

    # Unpadded x read / unpadded output write: last block dim == full array dim.
    in_specs = [pl.BlockSpec((bt, indim), lambda i: (i, 0))] + param_specs
    out_spec = pl.BlockSpec((bt, outdim), lambda i: (i, 0))

    # VMEM budget: resident params + double-buffered x/out tiles + activation
    # temps, with headroom; clamp to ~80% of this generation's physical VMEM.
    max_fo = max(w.shape[1] for w, _ in params)
    act_bytes = bt * max_fo * 4
    io_bytes = 2 * bt * (indim + outdim) * 4
    vmem_limit = int(1.5 * (param_bytes + io_bytes + 8 * act_bytes)) + (2 << 20)
    vmem_limit = max(4 << 20, min(vmem_limit, int(0.8 * _physical_vmem_bytes())))
    # TODO(synk): for widths where resident bf16 params exceed ~0.6x VMEM
    # (esp. v7x's 64 MiB), stream per-layer weights with pltpu.emit_pipeline
    # instead of resident specs.

    out = pl.pallas_call(
        _make_fcnet_kernel(n_linear, act_dtype),
        out_shape=jax.ShapeDtypeStruct((B_p, outdim), x.dtype),
        grid_spec=pltpu.PrefetchScalarGridSpec(
            num_scalar_prefetch=0,
            grid=(steps,),
            in_specs=in_specs,
            out_specs=out_spec,
        ),
        compiler_params=pltpu.CompilerParams(
            dimension_semantics=("parallel",),
            vmem_limit_bytes=vmem_limit,
        ),
    )(x_in, *param_arrays)

    return out[:B] if B_p != B else out


def init_fcnet_params(key, indim, outdim, nlayers, width):
    """Deterministic init matching nn.Linear shapes (U(-1/sqrt(fan_in), +))."""
    dims = [indim] + [width] * (nlayers + 1) + [outdim]
    weights, biases = [], []
    for i in range(len(dims) - 1):
        fan_in, fan_out = dims[i], dims[i + 1]
        key, kw, kb = jax.random.split(key, 3)
        bound = 1.0 / jnp.sqrt(fan_in)
        # PyTorch stores weight as (out, in); we keep (in, out) = weight.T
        w = jax.random.uniform(kw, (fan_in, fan_out), jnp.float32, -bound, bound)
        b = jax.random.uniform(kb, (fan_out,), jnp.float32, -bound, bound)
        weights.append(w)
        biases.append(b)
    return weights, biases


def fcnet_reference(x, weights, biases):
    """Full-f32 reference = semantics of the original PyTorch module."""
    h = x
    for w, b in zip(weights, biases):
        h = jax.nn.sigmoid(jnp.dot(h, w, preferred_element_type=jnp.float32) + b)
    return h


def fcnet_matched_reference(x, params, act_dtype):
    """Pure-JAX reference matching the kernel's padded params and precision."""
    h = x
    for w_p, b_p in params:
        z = jnp.dot(h.astype(jnp.bfloat16), w_p,
                    preferred_element_type=jnp.float32) + b_p
        z = z.astype(act_dtype)
        h = 0.5 * jnp.tanh(0.5 * z) + 0.5
    return h.astype(x.dtype)


if __name__ == "__main__":
    # _FCNet(indim=8, outdim=4, nlayers=2, width=32) -> 4 Linear+Sigmoid layers.
    indim, outdim, nlayers, width = 8, 4, 2, 32
    batch = 16

    key = jax.random.PRNGKey(0)
    key, kx = jax.random.split(key)
    x = jax.random.normal(kx, (batch, indim), jnp.float32)

    weights, biases = init_fcnet_params(key, indim, outdim, nlayers, width)
    params = prepare_fcnet_params(weights, biases)   # one-time pad + bf16 cast

    out = fcnet_pallas(x, params)
    out = jax.block_until_ready(out)
    assert out.shape == (batch, outdim)

    # Matched-precision reference (same padded params / bf16 MXU / act dtype).
    act_dtype = _act_dtype_for_device()
    ref_matched = fcnet_matched_reference(x, params, act_dtype)
    assert jnp.allclose(out, ref_matched, atol=5e-3, rtol=5e-3), "mismatch vs matched ref"

    # Full-f32 reference = semantics of the original PyTorch module.
    ref_f32 = fcnet_reference(x, weights, biases)
    assert jnp.allclose(out, ref_f32, atol=2.5e-2, rtol=2.5e-2), "mismatch vs f32 ref"

    print("KERNEL_OK")
</pallas_src>

<mosaic_0001>
module attributes {stable_mosaic.version = 11 : i64} {
  func.func @kernel(%arg0: i32, %arg1: memref<8x8xf32, #tpu.memory_space<vmem>>, %arg2: memref<8x128xbf16, #tpu.memory_space<vmem>>, %arg3: memref<1x128xf32, #tpu.memory_space<vmem>>, %arg4: memref<128x128xbf16, #tpu.memory_space<vmem>>, %arg5: memref<1x128xf32, #tpu.memory_space<vmem>>, %arg6: memref<128x128xbf16, #tpu.memory_space<vmem>>, %arg7: memref<1x128xf32, #tpu.memory_space<vmem>>, %arg8: memref<128x4xbf16, #tpu.memory_space<vmem>>, %arg9: memref<1x4xf32, #tpu.memory_space<vmem>>, %arg10: memref<8x4xf32, #tpu.memory_space<vmem>>) attributes {dimension_semantics = [#tpu.dimension_semantics<parallel>], iteration_bounds = array<i64: 2>, scalar_prefetch = 0 : i64, scratch_operands = 0 : i64, tpu.core_type = #tpu.core_type<tc>, window_params = [{transform_indices = @transform_0, window_bounds = array<i64: 8, 8>}, {pipeline_mode = #tpu.pipeline_mode<synchronous>, transform_indices = @transform_1, window_bounds = array<i64: 8, 128>}, {pipeline_mode = #tpu.pipeline_mode<synchronous>, transform_indices = @transform_2, window_bounds = array<i64: 1, 128>}, {pipeline_mode = #tpu.pipeline_mode<synchronous>, transform_indices = @transform_3, window_bounds = array<i64: 128, 128>}, {pipeline_mode = #tpu.pipeline_mode<synchronous>, transform_indices = @transform_4, window_bounds = array<i64: 1, 128>}, {pipeline_mode = #tpu.pipeline_mode<synchronous>, transform_indices = @transform_5, window_bounds = array<i64: 128, 128>}, {pipeline_mode = #tpu.pipeline_mode<synchronous>, transform_indices = @transform_6, window_bounds = array<i64: 1, 128>}, {pipeline_mode = #tpu.pipeline_mode<synchronous>, transform_indices = @transform_7, window_bounds = array<i64: 128, 4>}, {pipeline_mode = #tpu.pipeline_mode<synchronous>, transform_indices = @transform_8, window_bounds = array<i64: 1, 4>}, {transform_indices = @transform_9, window_bounds = array<i64: 8, 4>}]} {
    %c0 = arith.constant 0 : index
    %c0_0 = arith.constant 0 : index
    %0 = vector.load %arg1[%c0, %c0_0] : memref<8x8xf32, #tpu.memory_space<vmem>>, vector<8x8xf32>
    %1 = arith.truncf %0 : vector<8x8xf32> to vector<8x8xbf16>
    %c0_1 = arith.constant 0 : index
    %c0_2 = arith.constant 0 : index
    %2 = vector.load %arg2[%c0_1, %c0_2] : memref<8x128xbf16, #tpu.memory_space<vmem>>, vector<8x128xbf16>
    %cst = arith.constant dense<0.000000e+00> : vector<8x128xf32>
    %3 = tpu.matmul %1, %2, %cst {dimension_numbers = #tpu.dot_dimension_numbers<[1], [0], [0], [1], [0, 0, 1, 1], [], []>} : vector<8x8xbf16>, vector<8x128xbf16>, vector<8x128xf32> -> vector<8x128xf32>
    %c0_3 = arith.constant 0 : index
    %c0_4 = arith.constant 0 : index
    %4 = vector.load %arg3[%c0_3, %c0_4] : memref<1x128xf32, #tpu.memory_space<vmem>>, vector<1x128xf32>
    %5 = vector.broadcast %4 : vector<1x128xf32> to vector<8x128xf32>
    %6 = arith.addf %3, %5 : vector<8x128xf32>
    %cst_5 = arith.constant 5.000000e-01 : f32
    %7 = vector.broadcast %cst_5 : f32 to vector<8x128xf32>
    %8 = arith.mulf %7, %6 : vector<8x128xf32>
    %9 = math.tanh %8 : vector<8x128xf32>
    %cst_6 = arith.constant 5.000000e-01 : f32
    %10 = vector.broadcast %cst_6 : f32 to vector<8x128xf32>
    %11 = arith.mulf %10, %9 : vector<8x128xf32>
    %cst_7 = arith.constant 5.000000e-01 : f32
    %12 = vector.broadcast %cst_7 : f32 to vector<8x128xf32>
    %13 = arith.addf %11, %12 : vector<8x128xf32>
    %14 = arith.truncf %13 : vector<8x128xf32> to vector<8x128xbf16>
    %c0_8 = arith.constant 0 : index
    %c0_9 = arith.constant 0 : index
    %15 = vector.load %arg4[%c0_8, %c0_9] : memref<128x128xbf16, #tpu.memory_space<vmem>>, vector<128x128xbf16>
    %cst_10 = arith.constant dense<0.000000e+00> : vector<8x128xf32>
    %16 = tpu.matmul %14, %15, %cst_10 {dimension_numbers = #tpu.dot_dimension_numbers<[1], [0], [0], [1], [0, 0, 1, 1], [], []>} : vector<8x128xbf16>, vector<128x128xbf16>, vector<8x128xf32> -> vector<8x128xf32>
    %c0_11 = arith.constant 0 : index
    %c0_12 = arith.constant 0 : index
    %17 = vector.load %arg5[%c0_11, %c0_12] : memref<1x128xf32, #tpu.memory_space<vmem>>, vector<1x128xf32>
    %18 = vector.broadcast %17 : vector<1x128xf32> to vector<8x128xf32>
    %19 = arith.addf %16, %18 : vector<8x128xf32>
    %cst_13 = arith.constant 5.000000e-01 : f32
    %20 = vector.broadcast %cst_13 : f32 to vector<8x128xf32>
    %21 = arith.mulf %20, %19 : vector<8x128xf32>
    %22 = math.tanh %21 : vector<8x128xf32>
    %cst_14 = arith.constant 5.000000e-01 : f32
    %23 = vector.broadcast %cst_14 : f32 to vector<8x128xf32>
    %24 = arith.mulf %23, %22 : vector<8x128xf32>
    %cst_15 = arith.constant 5.000000e-01 : f32
    %25 = vector.broadcast %cst_15 : f32 to vector<8x128xf32>
    %26 = arith.addf %24, %25 : vector<8x128xf32>
    %27 = arith.truncf %26 : vector<8x128xf32> to vector<8x128xbf16>
    %c0_16 = arith.constant 0 : index
    %c0_17 = arith.constant 0 : index
    %28 = vector.load %arg6[%c0_16, %c0_17] : memref<128x128xbf16, #tpu.memory_space<vmem>>, vector<128x128xbf16>
    %cst_18 = arith.constant dense<0.000000e+00> : vector<8x128xf32>
    %29 = tpu.matmul %27, %28, %cst_18 {dimension_numbers = #tpu.dot_dimension_numbers<[1], [0], [0], [1], [0, 0, 1, 1], [], []>} : vector<8x128xbf16>, vector<128x128xbf16>, vector<8x128xf32> -> vector<8x128xf32>
    %c0_19 = arith.constant 0 : index
    %c0_20 = arith.constant 0 : index
    %30 = vector.load %arg7[%c0_19, %c0_20] : memref<1x128xf32, #tpu.memory_space<vmem>>, vector<1x128xf32>
    %31 = vector.broadcast %30 : vector<1x128xf32> to vector<8x128xf32>
    %32 = arith.addf %29, %31 : vector<8x128xf32>
    %cst_21 = arith.constant 5.000000e-01 : f32
    %33 = vector.broadcast %cst_21 : f32 to vector<8x128xf32>
    %34 = arith.mulf %33, %32 : vector<8x128xf32>
    %35 = math.tanh %34 : vector<8x128xf32>
    %cst_22 = arith.constant 5.000000e-01 : f32
    %36 = vector.broadcast %cst_22 : f32 to vector<8x128xf32>
    %37 = arith.mulf %36, %35 : vector<8x128xf32>
    %cst_23 = arith.constant 5.000000e-01 : f32
    %38 = vector.broadcast %cst_23 : f32 to vector<8x128xf32>
    %39 = arith.addf %37, %38 : vector<8x128xf32>
    %40 = arith.truncf %39 : vector<8x128xf32> to vector<8x128xbf16>
    %c0_24 = arith.constant 0 : index
    %c0_25 = arith.constant 0 : index
    %41 = vector.load %arg8[%c0_24, %c0_25] : memref<128x4xbf16, #tpu.memory_space<vmem>>, vector<128x4xbf16>
    %cst_26 = arith.constant dense<0.000000e+00> : vector<8x4xf32>
    %42 = tpu.matmul %40, %41, %cst_26 {dimension_numbers = #tpu.dot_dimension_numbers<[1], [0], [0], [1], [0, 0, 1, 1], [], []>} : vector<8x128xbf16>, vector<128x4xbf16>, vector<8x4xf32> -> vector<8x4xf32>
    %c0_27 = arith.constant 0 : index
    %c0_28 = arith.constant 0 : index
    %43 = vector.load %arg9[%c0_27, %c0_28] : memref<1x4xf32, #tpu.memory_space<vmem>>, vector<1x4xf32>
    %44 = vector.broadcast %43 : vector<1x4xf32> to vector<8x4xf32>
    %45 = arith.addf %42, %44 : vector<8x4xf32>
    %cst_29 = arith.constant 5.000000e-01 : f32
    %46 = vector.broadcast %cst_29 : f32 to vector<8x4xf32>
    %47 = arith.mulf %46, %45 : vector<8x4xf32>
    %48 = math.tanh %47 : vector<8x4xf32>
    %cst_30 = arith.constant 5.000000e-01 : f32
    %49 = vector.broadcast %cst_30 : f32 to vector<8x4xf32>
    %50 = arith.mulf %49, %48 : vector<8x4xf32>
    %cst_31 = arith.constant 5.000000e-01 : f32
    %51 = vector.broadcast %cst_31 : f32 to vector<8x4xf32>
    %52 = arith.addf %50, %51 : vector<8x4xf32>
    %c0_32 = arith.constant 0 : index
    %c0_33 = arith.constant 0 : index
    %53 = vector.load %arg10[%c0_32, %c0_33] : memref<8x4xf32, #tpu.memory_space<vmem>>, vector<8x4xf32>
    tpu.vector_store %arg10[%c0_32, %c0_33], %52 {strides = array<i32>} : memref<8x4xf32, #tpu.memory_space<vmem>>, vector<8x4xf32>,
    return
  }
  func.func @transform_0(%arg0: i32) -> (i32, i32) {
    %c0_i32 = arith.constant 0 : i32
    %c0_i32_0 = arith.constant 0 : i32
    return %arg0, %c0_i32 : i32, i32
  }
  func.func @transform_1(%arg0: i32) -> (i32, i32) {
    %c0_i32 = arith.constant 0 : i32
    %c0_i32_0 = arith.constant 0 : i32
    %c0_i32_1 = arith.constant 0 : i32
    return %c0_i32, %c0_i32_0 : i32, i32
  }
  func.func @transform_2(%arg0: i32) -> (i32, i32) {
    %c0_i32 = arith.constant 0 : i32
    %c0_i32_0 = arith.constant 0 : i32
    %c0_i32_1 = arith.constant 0 : i32
    return %c0_i32, %c0_i32_0 : i32, i32
  }
  func.func @transform_3(%arg0: i32) -> (i32, i32) {
    %c0_i32 = arith.constant 0 : i32
    %c0_i32_0 = arith.constant 0 : i32
    %c0_i32_1 = arith.constant 0 : i32
    return %c0_i32, %c0_i32_0 : i32, i32
  }
  func.func @transform_4(%arg0: i32) -> (i32, i32) {
    %c0_i32 = arith.constant 0 : i32
    %c0_i32_0 = arith.constant 0 : i32
    %c0_i32_1 = arith.constant 0 : i32
    return %c0_i32, %c0_i32_0 : i32, i32
  }
  func.func @transform_5(%arg0: i32) -> (i32, i32) {
    %c0_i32 = arith.constant 0 : i32
    %c0_i32_0 = arith.constant 0 : i32
    %c0_i32_1 = arith.constant 0 : i32
    return %c0_i32, %c0_i32_0 : i32, i32
  }
  func.func @transform_6(%arg0: i32) -> (i32, i32) {
    %c0_i32 = arith.constant 0 : i32
    %c0_i32_0 = arith.constant 0 : i32
    %c0_i32_1 = arith.constant 0 : i32
    return %c0_i32, %c0_i32_0 : i32, i32
  }
  func.func @transform_7(%arg0: i32) -> (i32, i32) {
    %c0_i32 = arith.constant 0 : i32
    %c0_i32_0 = arith.constant 0 : i32
    %c0_i32_1 = arith.constant 0 : i32
    return %c0_i32, %c0_i32_0 : i32, i32
  }
  func.func @transform_8(%arg0: i32) -> (i32, i32) {
    %c0_i32 = arith.constant 0 : i32
    %c0_i32_0 = arith.constant 0 : i32
    %c0_i32_1 = arith.constant 0 : i32
    return %c0_i32, %c0_i32_0 : i32, i32
  }
  func.func @transform_9(%arg0: i32) -> (i32, i32) {
    %c0_i32 = arith.constant 0 : i32
    %c0_i32_0 = arith.constant 0 : i32
    return %arg0, %c0_i32 : i32, i32
  }
}

</mosaic_0001>

<llo_original>
// kernel: tpu_custom_call.1
$region0: #{tpu_custom_call.1}
  #allocation0 [shape = 'u32[]', space=smem, size = 0x4, offset = 0x4, fixed_abs, tag = 'smem constant byte address 0x4 - core index']
  #allocation1 [shape = 'u32[144,128]{1,0:T(1,128)}', space=vmem, size = 0x12000, scoped, tag = 'internal scratch']
  %s0 = inlined_call_operand.vmem [shape: f32[16,8], index: 0, kind: input, shape index: {}]
  %s1 = inlined_call_operand.vmem [shape: bf16[8,128], index: 1, kind: input, shape index: {}]
  %s2 = inlined_call_operand.vmem [shape: f32[1,128], index: 2, kind: input, shape index: {}]
  %s3 = inlined_call_operand.vmem [shape: bf16[128,128], index: 3, kind: input, shape index: {}]
  %s4 = inlined_call_operand.vmem [shape: f32[1,128], index: 4, kind: input, shape index: {}]
  %s5 = inlined_call_operand.hbm [shape: bf16[128,128], index: 5, kind: input, shape index: {}]
  %s6 = inlined_call_operand.vmem [shape: f32[1,128], index: 6, kind: input, shape index: {}]
  %s7 = inlined_call_operand.vmem [shape: bf16[128,4], index: 7, kind: input, shape index: {}]
  %s8 = inlined_call_operand.vmem [shape: f32[1,4], index: 8, kind: input, shape index: {}]
  %s9 = inlined_call_operand.vmem [shape: f32[16,4], index: 9, kind: output, shape index: {}]
  %s10 = sld [smem:[#allocation0]]
  $region73: #{tpu_custom_call.1} parent=0
    _
  %s12 = ssub.s32 1, %s10
  %s13 = scalar_select 0, %s12, %s10
  $region1: #{tpu_custom_call.1} parent=0
    #allocation2 [shape = 'u8[32768]{0}', space=vmem, size = 0x8000, scoped, tag = 'input window, operand 5, single buffered']
    #allocation3 [shape = 's32[2]{0}', space=sflag, size = 0x8, scoped, tag = 'scoped memory for tpu_custom_call.1']
    %14 = vsyncpa [#allocation3], 0
    loop: start=0, step=1, limit=4
    $region2: #{tpu_custom_call.1} parent=1 // loop_pre_header
      _
    $region3: #{tpu_custom_call.1} parent=1 // loop_header
      %s16 = sphi 0, %s20
      %p17 = scmp.ge.s32.totalorder %s16, 4
      %s26 = sphi 0, %s28
      %s29 = sphi 0, %s26
      %s30 = sphi 0, %s29
      %s46 = sphi 0, %s30
      %s50 = sphi 0, %s50
      %s52 = sphi 0, %s50
      %s53 = sphi 0, %s52
      %s67 = sphi 0, %s53
      %s71 = sphi 0, %s71
      %s73 = sphi 0, %s71
      %s74 = sphi 0, %s73
      %s88 = sphi 0, %s74
      %s92 = sphi 0, %s92
      %s94 = sphi 0, %s92
      %s95 = sphi 0, %s94
      %s109 = sphi 0, %s95
      %s113 = sphi 0, %s113
      %s115 = sphi 0, %s113
      %s116 = sphi 0, %s115
      %s130 = sphi 0, %s116
      %s134 = sphi 0, %s134
      %s136 = sphi 0, %s134
      %s137 = sphi 0, %s136
      %s151 = sphi 0, %s137
      %s155 = sphi 0, %s155
      %s157 = sphi 0, %s155
      %s158 = sphi 0, %s157
      %s172 = sphi 0, %s158
      %s176 = sphi 0, %s176
      %s178 = sphi 0, %s176
      %s179 = sphi 0, %s178
      %s193 = sphi 0, %s179
      %s197 = sphi 0, %s197
      %s199 = sphi 0, %s197
      %s200 = sphi 0, %s199
      %s214 = sphi 0, %s200
      %s220 = sphi 0, %s222
      %s223 = sphi 0, %s220
      %s224 = sphi 0, %s223
      %s240 = sphi 0, %s224
    $region4: #{tpu_custom_call.1} parent=1 // loop_header_branch
      %19 = sbr.rel (%p17) target = $region8
    $region5: #{tpu_custom_call.1} parent=1 // loop_body
      %s21 = ssub.s32 %s16, 1
      %s22 = ssub.s32 %s16, 2
      %s23 = sadd.s32 %s16, 1
      %s24 = ssub.s32 %s16, %s23
      %p25 = scmp.eq.s32.totalorder %s24, 0
      %s27 = sadd.s32 %s26, 1
      %s28 = scalar_select %p25, %s26, %s27
      %p31 = pneg %p25
      %p32 = scmp.eq.s32.totalorder %s16, 1
      %p33 = por %p31, %p32
      %p34 = scmp.ne.s32.totalorder %s26, %s29
      %p35 = scmp.eq.s32.totalorder %s16, 0
      %p36 = por %p34, %p35
      %p37 = scmp.ne.s32.totalorder %s26, %s29
      %p38 = scmp.eq.s32.totalorder %s21, 1
      %p39 = por %p37, %p38
      %p40 = scmp.ne.s32.totalorder %s29, %s30
      %p41 = scmp.eq.s32.totalorder %s21, 0
      %p42 = por %p40, %p41
      %p43 = scmp.ne.s32.totalorder %s29, %s30
      %p44 = scmp.eq.s32.totalorder %s22, 1
      %p45 = por %p43, %p44
      %p47 = scmp.ne.s32.totalorder %s30, %s46
      %p48 = scmp.eq.s32.totalorder %s22, 0
      %p49 = por %p47, %p48
      %s51 = sadd.s32 %s50, 1
      %p54 = scmp.eq.s32.totalorder %s16, 1
      %p55 = scmp.ne.s32.totalorder %s50, %s52
      %p56 = scmp.eq.s32.totalorder %s16, 0
      %p57 = por %p55, %p56
      %p58 = scmp.ne.s32.totalorder %s50, %s52
      %p59 = scmp.eq.s32.totalorder %s21, 1
      %p60 = por %p58, %p59
      %p61 = scmp.ne.s32.totalorder %s52, %s53
      %p62 = scmp.eq.s32.totalorder %s21, 0
      %p63 = por %p61, %p62
      %p64 = scmp.ne.s32.totalorder %s52, %s53
      %p65 = scmp.eq.s32.totalorder %s22, 1
      %p66 = por %p64, %p65
      %p68 = scmp.ne.s32.totalorder %s53, %s67
      %p69 = scmp.eq.s32.totalorder %s22, 0
      %p70 = por %p68, %p69
      %s72 = sadd.s32 %s71, 1
      %p75 = scmp.eq.s32.totalorder %s16, 1
      %p76 = scmp.ne.s32.totalorder %s71, %s73
      %p77 = scmp.eq.s32.totalorder %s16, 0
      %p78 = por %p76, %p77
      %p79 = scmp.ne.s32.totalorder %s71, %s73
      %p80 = scmp.eq.s32.totalorder %s21, 1
      %p81 = por %p79, %p80
      %p82 = scmp.ne.s32.totalorder %s73, %s74
      %p83 = scmp.eq.s32.totalorder %s21, 0
      %p84 = por %p82, %p83
      %p85 = scmp.ne.s32.totalorder %s73, %s74
      %p86 = scmp.eq.s32.totalorder %s22, 1
      %p87 = por %p85, %p86
      %p89 = scmp.ne.s32.totalorder %s74, %s88
      %p90 = scmp.eq.s32.totalorder %s22, 0
      %p91 = por %p89, %p90
      %s93 = sadd.s32 %s92, 1
      %p96 = scmp.eq.s32.totalorder %s16, 1
      %p97 = scmp.ne.s32.totalorder %s92, %s94
      %p98 = scmp.eq.s32.totalorder %s16, 0
      %p99 = por %p97, %p98
      %p100 = scmp.ne.s32.totalorder %s92, %s94
      %p101 = scmp.eq.s32.totalorder %s21, 1
      %p102 = por %p100, %p101
      %p103 = scmp.ne.s32.totalorder %s94, %s95
      %p104 = scmp.eq.s32.totalorder %s21, 0
      %p105 = por %p103, %p104
      %p106 = scmp.ne.s32.totalorder %s94, %s95
      %p107 = scmp.eq.s32.totalorder %s22, 1
      %p108 = por %p106, %p107
      %p110 = scmp.ne.s32.totalorder %s95, %s109
      %p111 = scmp.eq.s32.totalorder %s22, 0
      %p112 = por %p110, %p111
      %s114 = sadd.s32 %s113, 1
      %p117 = scmp.eq.s32.totalorder %s16, 1
      %p118 = scmp.ne.s32.totalorder %s113, %s115
      %p119 = scmp.eq.s32.totalorder %s16, 0
      %p120 = por %p118, %p119
      %p121 = scmp.ne.s32.totalorder %s113, %s115
      %p122 = scmp.eq.s32.totalorder %s21, 1
      %p123 = por %p121, %p122
      %p124 = scmp.ne.s32.totalorder %s115, %s116
      %p125 = scmp.eq.s32.totalorder %s21, 0
      %p126 = por %p124, %p125
      %p127 = scmp.ne.s32.totalorder %s115, %s116
      %p128 = scmp.eq.s32.totalorder %s22, 1
      %p129 = por %p127, %p128
      %p131 = scmp.ne.s32.totalorder %s116, %s130
      %p132 = scmp.eq.s32.totalorder %s22, 0
      %p133 = por %p131, %p132
      %s135 = sadd.s32 %s134, 1
      %p138 = scmp.eq.s32.totalorder %s16, 1
      %p139 = scmp.ne.s32.totalorder %s134, %s136
      %p140 = scmp.eq.s32.totalorder %s16, 0
      %p141 = por %p139, %p140
      %p142 = scmp.ne.s32.totalorder %s134, %s136
      %p143 = scmp.eq.s32.totalorder %s21, 1
      %p144 = por %p142, %p143
      %p145 = scmp.ne.s32.totalorder %s136, %s137
      %p146 = scmp.eq.s32.totalorder %s21, 0
      %p147 = por %p145, %p146
      %p148 = scmp.ne.s32.totalorder %s136, %s137
      %p149 = scmp.eq.s32.totalorder %s22, 1
      %p150 = por %p148, %p149
      %p152 = scmp.ne.s32.totalorder %s137, %s151
      %p153 = scmp.eq.s32.totalorder %s22, 0
      %p154 = por %p152, %p153
      %s156 = sadd.s32 %s155, 1
      %p159 = scmp.eq.s32.totalorder %s16, 1
      %p160 = scmp.ne.s32.totalorder %s155, %s157
      %p161 = scmp.eq.s32.totalorder %s16, 0
      %p162 = por %p160, %p161
      %p163 = scmp.ne.s32.totalorder %s155, %s157
      %p164 = scmp.eq.s32.totalorder %s21, 1
      %p165 = por %p163, %p164
      %p166 = scmp.ne.s32.totalorder %s157, %s158
      %p167 = scmp.eq.s32.totalorder %s21, 0
      %p168 = por %p166, %p167
      %p169 = scmp.ne.s32.totalorder %s157, %s158
      %p170 = scmp.eq.s32.totalorder %s22, 1
      %p171 = por %p169, %p170
      %p173 = scmp.ne.s32.totalorder %s158, %s172
      %p174 = scmp.eq.s32.totalorder %s22, 0
      %p175 = por %p173, %p174
      %s177 = sadd.s32 %s176, 1
      %p180 = scmp.eq.s32.totalorder %s16, 1
      %p181 = scmp.ne.s32.totalorder %s176, %s178
      %p182 = scmp.eq.s32.totalorder %s16, 0
      %p183 = por %p181, %p182
      %p184 = scmp.ne.s32.totalorder %s176, %s178
      %p185 = scmp.eq.s32.totalorder %s21, 1
      %p186 = por %p184, %p185
      %p187 = scmp.ne.s32.totalorder %s178, %s179
      %p188 = scmp.eq.s32.totalorder %s21, 0
      %p189 = por %p187, %p188
      %p190 = scmp.ne.s32.totalorder %s178, %s179
      %p191 = scmp.eq.s32.totalorder %s22, 1
      %p192 = por %p190, %p191
      %p194 = scmp.ne.s32.totalorder %s179, %s193
      %p195 = scmp.eq.s32.totalorder %s22, 0
      %p196 = por %p194, %p195
      %s198 = sadd.s32 %s197, 1
      %p201 = scmp.eq.s32.totalorder %s16, 1
      %p202 = scmp.ne.s32.totalorder %s197, %s199
      %p203 = scmp.eq.s32.totalorder %s16, 0
      %p204 = por %p202, %p203
      %p205 = scmp.ne.s32.totalorder %s197, %s199
      %p206 = scmp.eq.s32.totalorder %s21, 1
      %p207 = por %p205, %p206
      %p208 = scmp.ne.s32.totalorder %s199, %s200
      %p209 = scmp.eq.s32.totalorder %s21, 0
      %p210 = por %p208, %p209
      %p211 = scmp.ne.s32.totalorder %s199, %s200
      %p212 = scmp.eq.s32.totalorder %s22, 1
      %p213 = por %p211, %p212
      %p215 = scmp.ne.s32.totalorder %s200, %s214
      %p216 = scmp.eq.s32.totalorder %s22, 0
      %p217 = por %p215, %p216
      %s218 = ssub.s32 %s16, %s23
      %p219 = scmp.eq.s32.totalorder %s218, 0
      %s221 = sadd.s32 %s220, 1
      %s222 = scalar_select %p219, %s220, %s221
      %p225 = pneg %p219
      %p226 = scmp.eq.s32.totalorder %s16, 1
      %p227 = por %p225, %p226
      %p228 = scmp.ne.s32.totalorder %s220, %s223
      %p229 = scmp.eq.s32.totalorder %s16, 0
      %p230 = por %p228, %p229
      %p231 = scmp.ne.s32.totalorder %s220, %s223
      %p232 = scmp.eq.s32.totalorder %s21, 1
      %p233 = por %p231, %p232
      %p234 = scmp.ne.s32.totalorder %s223, %s224
      %p235 = scmp.eq.s32.totalorder %s21, 0
      %p236 = por %p234, %p235
      %p237 = scmp.ne.s32.totalorder %s223, %s224
      %p238 = scmp.eq.s32.totalorder %s22, 1
      %p239 = por %p237, %p238
      %p241 = scmp.ne.s32.totalorder %s224, %s240
      %p242 = scmp.eq.s32.totalorder %s22, 0
      %p243 = por %p241, %p242
      %p244 = scmp.le.s32.totalorder 1, %s16
      %p245 = scmp.lt.s32.totalorder %s16, 3
      %p246 = pnand %p244, %p245
      %p247 = pneg %p246
      // Predicated region
      $region9: #{tpu_custom_call.1} parent=5 // pred_check
        _
      $region10: #{tpu_custom_call.1} parent=5 // pred_check_branch
        %249 = sbr.rel (%p246) target = $region12
      $region11: #{tpu_custom_call.1} parent=5 // pred_region
        %s250 = ssub.s32 %s16, 1
        // Predicated region
        $region13: #{tpu_custom_call.1} parent=11 // pred_check
          %p251 = pneg %p63
        $region14: #{tpu_custom_call.1} parent=11 // pred_check_branch
          %253 = sbr.rel (%p251) target = $region16
        $region15: #{tpu_custom_call.1} parent=11 // pred_region
          _
        $region16: #{tpu_custom_call.1} parent=11 // pred_fallthru
          _
        // Predicated region
        $region17: #{tpu_custom_call.1} parent=11 // pred_check
          %p254 = pneg %p84
        $region18: #{tpu_custom_call.1} parent=11 // pred_check_branch
          %256 = sbr.rel (%p254) target = $region20
        $region19: #{tpu_custom_call.1} parent=11 // pred_region
          _
        $region20: #{tpu_custom_call.1} parent=11 // pred_fallthru
          _
        // Predicated region
        $region21: #{tpu_custom_call.1} parent=11 // pred_check
          %p257 = pneg %p105
        $region22: #{tpu_custom_call.1} parent=11 // pred_check_branch
          %259 = sbr.rel (%p257) target = $region24
        $region23: #{tpu_custom_call.1} parent=11 // pred_region
          _
        $region24: #{tpu_custom_call.1} parent=11 // pred_fallthru
          _
        // Predicated region
        $region25: #{tpu_custom_call.1} parent=11 // pred_check
          %p260 = pneg %p126
        $region26: #{tpu_custom_call.1} parent=11 // pred_check_branch
          %262 = sbr.rel (%p260) target = $region28
        $region27: #{tpu_custom_call.1} parent=11 // pred_region
          _
        $region28: #{tpu_custom_call.1} parent=11 // pred_fallthru
          _
        // Predicated region
        $region29: #{tpu_custom_call.1} parent=11 // pred_check
          %p263 = pneg %p147
        $region30: #{tpu_custom_call.1} parent=11 // pred_check_branch
          %265 = sbr.rel (%p263) target = $region32
        $region31: #{tpu_custom_call.1} parent=11 // pred_region
          %s267 = ssub.s32 1024, 1024
          %268 = vsyncadd [#allocation3], %s267
          %s269 = sshll.u32 [#allocation2], 4
          %s270 = int_to_ptr.vmem [resolvable:$true] %s269
          %275 = dma.hbm_to_vmem [thread:$0]  %s5, 1024, %s270, [#allocation3], 64, 64, 4
        $region32: #{tpu_custom_call.1} parent=11 // pred_fallthru
          _
        // Predicated region
        $region33: #{tpu_custom_call.1} parent=11 // pred_check
          %p276 = pneg %p168
        $region34: #{tpu_custom_call.1} parent=11 // pred_check_branch
          %278 = sbr.rel (%p276) target = $region36
        $region35: #{tpu_custom_call.1} parent=11 // pred_region
          _
        $region36: #{tpu_custom_call.1} parent=11 // pred_fallthru
          _
        // Predicated region
        $region37: #{tpu_custom_call.1} parent=11 // pred_check
          %p279 = pneg %p189
        $region38: #{tpu_custom_call.1} parent=11 // pred_check_branch
          %281 = sbr.rel (%p279) target = $region40
        $region39: #{tpu_custom_call.1} parent=11 // pred_region
          _
        $region40: #{tpu_custom_call.1} parent=11 // pred_fallthru
          _
        // Predicated region
        $region41: #{tpu_custom_call.1} parent=11 // pred_check
          %p282 = pneg %p210
        $region42: #{tpu_custom_call.1} parent=11 // pred_check_branch
          %284 = sbr.rel (%p282) target = $region44
        $region43: #{tpu_custom_call.1} parent=11 // pred_region
          _
        $region44: #{tpu_custom_call.1} parent=11 // pred_fallthru
          _
      $region12: #{tpu_custom_call.1} parent=5 // pred_fallthru
        _
      %p285 = scmp.lt.s32.totalorder %s16, 2
      // Predicated region
      $region45: #{tpu_custom_call.1} parent=5 // pred_check
        %p286 = pneg %p285
      $region46: #{tpu_custom_call.1} parent=5 // pred_check_branch
        %288 = sbr.rel (%p286) target = $region48
      $region47: #{tpu_custom_call.1} parent=5 // pred_region
        // Predicated region
        $region49: #{tpu_custom_call.1} parent=47 // pred_check
          %p289 = pneg %p36
        $region50: #{tpu_custom_call.1} parent=47 // pred_check_branch
          %291 = sbr.rel (%p289) target = $region52
        $region51: #{tpu_custom_call.1} parent=47 // pred_region
          %p292 = scmp.lt.s32.totalorder %s16, 1
          %s293 = scalar_select %p292, %s16, 1
          %s294 = smul.addr %s293, 8
          %s295 = scalar_lea.vmem %s0, %s294
        $region52: #{tpu_custom_call.1} parent=47 // pred_fallthru
          _
      $region48: #{tpu_custom_call.1} parent=5 // pred_fallthru
        _
      %p296 = scmp.le.s32.totalorder 1, %s16
      %p297 = scmp.lt.s32.totalorder %s16, 3
      %p298 = pnand %p296, %p297
      %p299 = pneg %p298
      // Predicated region
      $region53: #{tpu_custom_call.1} parent=5 // pred_check
        _
      $region54: #{tpu_custom_call.1} parent=5 // pred_check_branch
        %301 = sbr.rel (%p298) target = $region56
      $region55: #{tpu_custom_call.1} parent=5 // pred_region
        %s302 = ssub.s32 %s16, 1
        // Predicated region
        $region57: #{tpu_custom_call.1} parent=55 // pred_check
          %p303 = pneg %p147
        $region58: #{tpu_custom_call.1} parent=55 // pred_check_branch
          %305 = sbr.rel (%p303) target = $region60
        $region59: #{tpu_custom_call.1} parent=55 // pred_region
          %306 = dma.done [#allocation3], 1024
        $region60: #{tpu_custom_call.1} parent=55 // pred_fallthru
          _
        %p307 = scmp.lt.s32.totalorder %s21, 1
        %s308 = scalar_select %p307, %s21, 1
        %s309 = smul.addr %s308, 8
        %s310 = scalar_lea.vmem %s0, %s309
        %p311 = pneg %p42
        %p312 = pneg %p39
        %p313 = pneg %p63
        %p314 = pneg %p60
        %p315 = pneg %p84
        %p316 = pneg %p81
        %p317 = pneg %p105
        %p318 = pneg %p102
        %p319 = pneg %p126
        %p320 = pneg %p123
        %p321 = pneg %p147
        %p322 = pneg %p144
        %p323 = pneg %p168
        %p324 = pneg %p165
        %p325 = pneg %p189
        %p326 = pneg %p186
        %p327 = pneg %p210
        %p328 = pneg %p207
        %p329 = pneg %p236
        %p330 = pneg %p233
        %p331 = scmp.lt.s32.totalorder %s21, 1
        %s332 = scalar_select %p331, %s21, 1
        %s333 = smul.addr %s332, 8
        %s334 = scalar_lea.vmem %s9, %s333
        %p335 = scmp.lt.s32.totalorder %s21, 1
        %s336 = scalar_select %p335, %s21, 1
        %s337 = smul.addr %s336, 8
        %s338 = scalar_lea.vmem %s0, %s337
        %p339 = scmp.lt.s32.totalorder %s21, 1
        %s340 = scalar_select %p339, %s21, 1
        %s341 = smul.addr %s340, 8
        %s342 = scalar_lea.vmem %s9, %s341
        %v344 = vld [vmem:[%s338] sm:$0xff]
        %v345 = vpack.c.bf16 %v344, %v344
        %v346 = vld [vmem:[%s1] sm:$0xf]
        %v347 = vld [vmem:[%s2] sm:$0x1]
        %v349 = vlaneseq
        %v350 = vshrl.u32 %v349, 7
        %v351 = vsub.s32 0, %v350
        %v352 = vrot.slane %v347, %v351
        %vm354 = vcmask 64512
        %v356 = vsel %vm354, %v345, 0
        %vm358 = vcmask 1043456
        %v360 = vsel %vm358, %v346, 0
        %362 = vmatprep.subr.bf16.mxu0 0
        %363 = vmatpush1.bf16.msra.mxu0 0
        %364 = vmatprep.subr.bf16.mxu0 0
        %365 = vmatpush1.bf16.msra.mxu0 0
        %366 = vmatprep.subr.bf16.mxu0 0
        %367 = vmatpush1.bf16.msra.mxu0 0
        %368 = vmatprep.subr.bf16.mxu0 0
        %369 = vmatpush1.bf16.msra.mxu0 0
        %370 = vmatprep.subr.bf16.mxu0 0
        %371 = vmatpush1.bf16.msra.mxu0 0
        %372 = vmatprep.subr.bf16.mxu0 0
        %373 = vmatpush1.bf16.msra.mxu0 0
        %374 = vmatprep.subr.bf16.mxu0 0
        %375 = vmatpush1.bf16.msra.mxu0 0
        %376 = vmatprep.subr.bf16.mxu0 0
        %377 = vmatpush1.bf16.msra.mxu0 %v360
        %378 = vmatprep.subr.bf16.mxu0 0
        %379 = vmatpush2.bf16.msra.mxu0 0
        %380 = vmatprep.subr.bf16.mxu0 0
        %381 = vmatpush2.bf16.msra.mxu0 0
        %382 = vmatprep.subr.bf16.mxu0 0
        %383 = vmatpush2.bf16.msra.mxu0 0
        %384 = vmatprep.subr.bf16.mxu0 0
        %385 = vmatpush2.bf16.msra.mxu0 0
        %386 = vmatprep.subr.bf16.mxu0 0
        %387 = vmatpush2.bf16.msra.mxu0 0
        %388 = vmatprep.subr.bf16.mxu0 0
        %389 = vmatpush2.bf16.msra.mxu0 0
        %390 = vmatprep.subr.bf16.mxu0 0
        %391 = vmatpush2.bf16.msra.mxu0 0
        %392 = vmatprep.subr.bf16.mxu0 0
        %393 = vmatpush2.bf16.msra.mxu0 0
        %394 = vmatprep.mubr.bf16.mxu0 0
        %395 = vmatmul.mubr.bf16.gmra.mxu0 %v356
        %v396 = vpop.f32.mrf.mxu0
        %v397 = vadd.f32 %v352, %v396
        %v398 = vpop.f32.mrf.mxu0
        %v399 = vpop.f32.mrf.mxu0
        %v400 = vpop.f32.mrf.mxu0
        %401 = vdwg.mxu0
        %v402 = vmul.f32 %v397, 0.5
        %v403 = vtanh.pop %v402
        %v404 = vmul.f32 %v403, 0.5
        %v405 = vadd.f32 %v404, 0.5
        %v406 = vpack.c.bf16 %v405, %v405
        %v407 = vld [vmem:[%s3] sm:$0xf]
        %v408 = vld [vmem:[%s3 + $0x4] sm:$0xf]
        %v409 = vld [vmem:[%s3 + $0x8] sm:$0xf]
        %v410 = vld [vmem:[%s3 + $0xc] sm:$0xf]
        %v411 = vld [vmem:[%s3 + $0x10] sm:$0xf]
        %v412 = vld [vmem:[%s3 + $0x14] sm:$0xf]
        %v413 = vld [vmem:[%s3 + $0x18] sm:$0xf]
        %v414 = vld [vmem:[%s3 + $0x1c] sm:$0xf]
        %v415 = vld [vmem:[%s3 + $0x20] sm:$0xf]
        %v416 = vld [vmem:[%s3 + $0x24] sm:$0xf]
        %v417 = vld [vmem:[%s3 + $0x28] sm:$0xf]
        %v418 = vld [vmem:[%s3 + $0x2c] sm:$0xf]
        %v419 = vld [vmem:[%s3 + $0x30] sm:$0xf]
        %v420 = vld [vmem:[%s3 + $0x34] sm:$0xf]
        %v421 = vld [vmem:[%s3 + $0x38] sm:$0xf]
        %v422 = vld [vmem:[%s3 + $0x3c] sm:$0xf]
        %v423 = vld [vmem:[%s4] sm:$0x1]
        %v425 = vlaneseq
        %v426 = vshrl.u32 %v425, 7
        %v427 = vsub.s32 0, %v426
        %v428 = vrot.slane %v423, %v427
        %v446 = vunpack.c.l.b16 %v407
        %v447 = vunpack.c.l.b16 %v408
        %v448 = vunpack.c.l.b16 %v409
        %v449 = vunpack.c.l.b16 %v410
        %v450 = vunpack.c.l.b16 %v411
        %v451 = vunpack.c.l.b16 %v412
        %v452 = vunpack.c.l.b16 %v413
        %v453 = vunpack.c.l.b16 %v414
        %v454 = vunpack.c.l.b16 %v415
        %v455 = vunpack.c.l.b16 %v416
        %v456 = vunpack.c.l.b16 %v417
        %v457 = vunpack.c.l.b16 %v418
        %v458 = vunpack.c.l.b16 %v419
        %v459 = vunpack.c.l.b16 %v420
        %v460 = vunpack.c.l.b16 %v421
        %v461 = vunpack.c.l.b16 %v422
        %v462 = vpack.c.b16 %v447, %v446
        %v463 = vpack.c.b16 %v449, %v448
        %v464 = vpack.c.b16 %v451, %v450
        %v465 = vpack.c.b16 %v453, %v452
        %v466 = vpack.c.b16 %v455, %v454
        %v467 = vpack.c.b16 %v457, %v456
        %v468 = vpack.c.b16 %v459, %v458
        %v469 = vpack.c.b16 %v461, %v460
        %478 = vmatprep.subr.bf16.mxu0 0
        %479 = vmatpush1.bf16.msra.mxu0 %v469
        %480 = vmatprep.subr.bf16.mxu0 0
        %481 = vmatpush1.bf16.msra.mxu0 %v468
        %482 = vmatprep.subr.bf16.mxu0 0
        %483 = vmatpush1.bf16.msra.mxu0 %v467
        %484 = vmatprep.subr.bf16.mxu0 0
        %485 = vmatpush1.bf16.msra.mxu0 %v466
        %486 = vmatprep.subr.bf16.mxu0 0
        %487 = vmatpush1.bf16.msra.mxu0 %v465
        %488 = vmatprep.subr.bf16.mxu0 0
        %489 = vmatpush1.bf16.msra.mxu0 %v464
        %490 = vmatprep.subr.bf16.mxu0 0
        %491 = vmatpush1.bf16.msra.mxu0 %v463
        %492 = vmatprep.subr.bf16.mxu0 0
        %493 = vmatpush1.bf16.msra.mxu0 %v462
        %494 = vmatprep.subr.bf16.mxu0 0
        %495 = vmatpush2.bf16.msra.mxu0 0
        %496 = vmatprep.subr.bf16.mxu0 0
        %497 = vmatpush2.bf16.msra.mxu0 0
        %498 = vmatprep.subr.bf16.mxu0 0
        %499 = vmatpush2.bf16.msra.mxu0 0
        %500 = vmatprep.subr.bf16.mxu0 0
        %501 = vmatpush2.bf16.msra.mxu0 0
        %502 = vmatprep.subr.bf16.mxu0 0
        %503 = vmatpush2.bf16.msra.mxu0 0
        %504 = vmatprep.subr.bf16.mxu0 0
        %505 = vmatpush2.bf16.msra.mxu0 0
        %506 = vmatprep.subr.bf16.mxu0 0
        %507 = vmatpush2.bf16.msra.mxu0 0
        %508 = vmatprep.subr.bf16.mxu0 0
        %509 = vmatpush2.bf16.msra.mxu0 0
        %510 = vmatprep.mubr.bf16.mxu0 0
        %511 = vmatmul.mubr.bf16.gmra.mxu0 %v406
        %v512 = vpop.f32.mrf.mxu0
        %v513 = vadd.f32 %v428, %v512
        %v514 = vpop.f32.mrf.mxu0
        %v515 = vpop.f32.mrf.mxu0
        %v516 = vpop.f32.mrf.mxu0
        %517 = vdwg.mxu0
        %v518 = vmul.f32 %v513, 0.5
        %v519 = vtanh.pop %v518
        %v520 = vmul.f32 %v519, 0.5
        %v521 = vadd.f32 %v520, 0.5
        %v522 = vpack.c.bf16 %v521, %v521
        %v523 = vld [vmem:[#allocation2] sm:$0xf]
        %v524 = vld [vmem:[#allocation2 + $0x4] sm:$0xf]
        %v525 = vld [vmem:[#allocation2 + $0x8] sm:$0xf]
        %v526 = vld [vmem:[#allocation2 + $0xc] sm:$0xf]
        %v527 = vld [vmem:[#allocation2 + $0x10] sm:$0xf]
        %v528 = vld [vmem:[#allocation2 + $0x14] sm:$0xf]
        %v529 = vld [vmem:[#allocation2 + $0x18] sm:$0xf]
        %v530 = vld [vmem:[#allocation2 + $0x1c] sm:$0xf]
        %v531 = vld [vmem:[#allocation2 + $0x20] sm:$0xf]
        %v532 = vld [vmem:[#allocation2 + $0x24] sm:$0xf]
        %v533 = vld [vmem:[#allocation2 + $0x28] sm:$0xf]
        %v534 = vld [vmem:[#allocation2 + $0x2c] sm:$0xf]
        %v535 = vld [vmem:[#allocation2 + $0x30] sm:$0xf]
        %v536 = vld [vmem:[#allocation2 + $0x34] sm:$0xf]
        %v537 = vld [vmem:[#allocation2 + $0x38] sm:$0xf]
        %v538 = vld [vmem:[#allocation2 + $0x3c] sm:$0xf]
        %v539 = vld [vmem:[%s6] sm:$0x1]
        %v541 = vlaneseq
        %v542 = vshrl.u32 %v541, 7
        %v543 = vsub.s32 0, %v542
        %v544 = vrot.slane %v539, %v543
        %v562 = vunpack.c.l.b16 %v523
        %v563 = vunpack.c.l.b16 %v524
        %v564 = vunpack.c.l.b16 %v525
        %v565 = vunpack.c.l.b16 %v526
        %v566 = vunpack.c.l.b16 %v527
        %v567 = vunpack.c.l.b16 %v528
        %v568 = vunpack.c.l.b16 %v529
        %v569 = vunpack.c.l.b16 %v530
        %v570 = vunpack.c.l.b16 %v531
        %v571 = vunpack.c.l.b16 %v532
        %v572 = vunpack.c.l.b16 %v533
        %v573 = vunpack.c.l.b16 %v534
        %v574 = vunpack.c.l.b16 %v535
        %v575 = vunpack.c.l.b16 %v536
        %v576 = vunpack.c.l.b16 %v537
        %v577 = vunpack.c.l.b16 %v538
        %v578 = vpack.c.b16 %v563, %v562
        %v579 = vpack.c.b16 %v565, %v564
        %v580 = vpack.c.b16 %v567, %v566
        %v581 = vpack.c.b16 %v569, %v568
        %v582 = vpack.c.b16 %v571, %v570
        %v583 = vpack.c.b16 %v573, %v572
        %v584 = vpack.c.b16 %v575, %v574
        %v585 = vpack.c.b16 %v577, %v576
        %594 = vmatprep.subr.bf16.mxu0 0
        %595 = vmatpush1.bf16.msra.mxu0 %v585
        %596 = vmatprep.subr.bf16.mxu0 0
        %597 = vmatpush1.bf16.msra.mxu0 %v584
        %598 = vmatprep.subr.bf16.mxu0 0
        %599 = vmatpush1.bf16.msra.mxu0 %v583
        %600 = vmatprep.subr.bf16.mxu0 0
        %601 = vmatpush1.bf16.msra.mxu0 %v582
        %602 = vmatprep.subr.bf16.mxu0 0
        %603 = vmatpush1.bf16.msra.mxu0 %v581
        %604 = vmatprep.subr.bf16.mxu0 0
        %605 = vmatpush1.bf16.msra.mxu0 %v580
        %606 = vmatprep.subr.bf16.mxu0 0
        %607 = vmatpush1.bf16.msra.mxu0 %v579
        %608 = vmatprep.subr.bf16.mxu0 0
        %609 = vmatpush1.bf16.msra.mxu0 %v578
        %610 = vmatprep.subr.bf16.mxu0 0
        %611 = vmatpush2.bf16.msra.mxu0 0
        %612 = vmatprep.subr.bf16.mxu0 0
        %613 = vmatpush2.bf16.msra.mxu0 0
        %614 = vmatprep.subr.bf16.mxu0 0
        %615 = vmatpush2.bf16.msra.mxu0 0
        %616 = vmatprep.subr.bf16.mxu0 0
        %617 = vmatpush2.bf16.msra.mxu0 0
        %618 = vmatprep.subr.bf16.mxu0 0
        %619 = vmatpush2.bf16.msra.mxu0 0
        %620 = vmatprep.subr.bf16.mxu0 0
        %621 = vmatpush2.bf16.msra.mxu0 0
        %622 = vmatprep.subr.bf16.mxu0 0
        %623 = vmatpush2.bf16.msra.mxu0 0
        %624 = vmatprep.subr.bf16.mxu0 0
        %625 = vmatpush2.bf16.msra.mxu0 0
        %626 = vmatprep.mubr.bf16.mxu0 0
        %627 = vmatmul.mubr.bf16.gmra.mxu0 %v522
        %v628 = vpop.f32.mrf.mxu0
        %v629 = vadd.f32 %v544, %v628
        %v630 = vpop.f32.mrf.mxu0
        %v631 = vpop.f32.mrf.mxu0
        %v632 = vpop.f32.mrf.mxu0
        %633 = vdwg.mxu0
        %v634 = vmul.f32 %v629, 0.5
        %v635 = vtanh.pop %v634
        %v636 = vmul.f32 %v635, 0.5
        %v637 = vadd.f32 %v636, 0.5
        %v638 = vpack.c.bf16 %v637, %v637
        %v639 = vld [vmem:[%s7] sm:$0xf]
        %v640 = vld [vmem:[%s7 + $0x4] sm:$0xf]
        %v641 = vld [vmem:[%s7 + $0x8] sm:$0xf]
        %v642 = vld [vmem:[%s7 + $0xc] sm:$0xf]
        %v643 = vld [vmem:[%s7 + $0x10] sm:$0xf]
        %v644 = vld [vmem:[%s7 + $0x14] sm:$0xf]
        %v645 = vld [vmem:[%s7 + $0x18] sm:$0xf]
        %v646 = vld [vmem:[%s7 + $0x1c] sm:$0xf]
        %v647 = vld [vmem:[%s7 + $0x20] sm:$0xf]
        %v648 = vld [vmem:[%s7 + $0x24] sm:$0xf]
        %v649 = vld [vmem:[%s7 + $0x28] sm:$0xf]
        %v650 = vld [vmem:[%s7 + $0x2c] sm:$0xf]
        %v651 = vld [vmem:[%s7 + $0x30] sm:$0xf]
        %v652 = vld [vmem:[%s7 + $0x34] sm:$0xf]
        %v653 = vld [vmem:[%s7 + $0x38] sm:$0xf]
        %v654 = vld [vmem:[%s7 + $0x3c] sm:$0xf]
        %v655 = vld [vmem:[%s8] sm:$0x1]
        %v657 = vlaneseq
        %v658 = vshrl.u32 %v657, 7
        %v659 = vsub.s32 0, %v658
        %v660 = vrot.slane %v655, %v659
        %v678 = vunpack.c.l.b16 %v639
        %v679 = vunpack.c.l.b16 %v640
        %v680 = vunpack.c.l.b16 %v641
        %v681 = vunpack.c.l.b16 %v642
        %v682 = vunpack.c.l.b16 %v643
        %v683 = vunpack.c.l.b16 %v644
        %v684 = vunpack.c.l.b16 %v645
        %v685 = vunpack.c.l.b16 %v646
        %v686 = vunpack.c.l.b16 %v647
        %v687 = vunpack.c.l.b16 %v648
        %v688 = vunpack.c.l.b16 %v649
        %v689 = vunpack.c.l.b16 %v650
        %v690 = vunpack.c.l.b16 %v651
        %v691 = vunpack.c.l.b16 %v652
        %v692 = vunpack.c.l.b16 %v653
        %v693 = vunpack.c.l.b16 %v654
        %v694 = vpack.c.b16 %v679, %v678
        %v695 = vpack.c.b16 %v681, %v680
        %v696 = vpack.c.b16 %v683, %v682
        %v697 = vpack.c.b16 %v685, %v684
        %v698 = vpack.c.b16 %v687, %v686
        %v699 = vpack.c.b16 %v689, %v688
        %v700 = vpack.c.b16 %v691, %v690
        %v701 = vpack.c.b16 %v693, %v692
        %710 = vmatprep.subr.bf16.mxu0 0
        %711 = vmatpush1.bf16.msra.mxu0 %v701
        %712 = vmatprep.subr.bf16.mxu0 0
        %713 = vmatpush1.bf16.msra.mxu0 %v700
        %714 = vmatprep.subr.bf16.mxu0 0
        %715 = vmatpush1.bf16.msra.mxu0 %v699
        %716 = vmatprep.subr.bf16.mxu0 0
        %717 = vmatpush1.bf16.msra.mxu0 %v698
        %718 = vmatprep.subr.bf16.mxu0 0
        %719 = vmatpush1.bf16.msra.mxu0 %v697
        %720 = vmatprep.subr.bf16.mxu0 0
        %721 = vmatpush1.bf16.msra.mxu0 %v696
        %722 = vmatprep.subr.bf16.mxu0 0
        %723 = vmatpush1.bf16.msra.mxu0 %v695
        %724 = vmatprep.subr.bf16.mxu0 0
        %725 = vmatpush1.bf16.msra.mxu0 %v694
        %726 = vmatprep.subr.bf16.mxu0 0
        %727 = vmatpush2.bf16.msra.mxu0 0
        %728 = vmatprep.subr.bf16.mxu0 0
        %729 = vmatpush2.bf16.msra.mxu0 0
        %730 = vmatprep.subr.bf16.mxu0 0
        %731 = vmatpush2.bf16.msra.mxu0 0
        %732 = vmatprep.subr.bf16.mxu0 0
        %733 = vmatpush2.bf16.msra.mxu0 0
        %734 = vmatprep.subr.bf16.mxu0 0
        %735 = vmatpush2.bf16.msra.mxu0 0
        %736 = vmatprep.subr.bf16.mxu0 0
        %737 = vmatpush2.bf16.msra.mxu0 0
        %738 = vmatprep.subr.bf16.mxu0 0
        %739 = vmatpush2.bf16.msra.mxu0 0
        %740 = vmatprep.subr.bf16.mxu0 0
        %741 = vmatpush2.bf16.msra.mxu0 0
        %742 = vmatprep.mubr.bf16.mxu0 0
        %743 = vmatmul.mubr.bf16.gmra.mxu0 %v638
        %v744 = vpop.f32.mrf.mxu0
        %v745 = vadd.f32 %v660, %v744
        %v746 = vpop.f32.mrf.mxu0
        %v747 = vpop.f32.mrf.mxu0
        %v748 = vpop.f32.mrf.mxu0
        %749 = vdwg.mxu0
        %v750 = vmul.f32 %v745, 0.5
        %v751 = vtanh.pop %v750
        %v752 = vmul.f32 %v751, 0.5
        %v753 = vadd.f32 %v752, 0.5
        %vm754 = vcmask 31744
        %755 = vst.msk [vmem:[%s342] sm:$0xff] %vm754, %v753
        %p756 = scmp.lt.s32.totalorder %s21, 1
        %s757 = scalar_select %p756, %s21, 1
        %s758 = smul.addr %s757, 8
        %s759 = scalar_lea.vmem %s9, %s758
        // Predicated region
        $region61: #{tpu_custom_call.1} parent=55 // pred_check
          %p760 = pneg %p233
        $region62: #{tpu_custom_call.1} parent=55 // pred_check_branch
          %762 = sbr.rel (%p760) target = $region64
        $region63: #{tpu_custom_call.1} parent=55 // pred_region
          _
        $region64: #{tpu_custom_call.1} parent=55 // pred_fallthru
          _
      $region56: #{tpu_custom_call.1} parent=5 // pred_fallthru
        _
      %p763 = scmp.le.s32.totalorder 2, %s16
      // Predicated region
      $region65: #{tpu_custom_call.1} parent=5 // pred_check
        %p764 = pneg %p763
      $region66: #{tpu_custom_call.1} parent=5 // pred_check_branch
        %766 = sbr.rel (%p764) target = $region68
      $region67: #{tpu_custom_call.1} parent=5 // pred_region
        %s767 = ssub.s32 %s16, 2
        // Predicated region
        $region69: #{tpu_custom_call.1} parent=67 // pred_check
          %p768 = pneg %p239
        $region70: #{tpu_custom_call.1} parent=67 // pred_check_branch
          %770 = sbr.rel (%p768) target = $region72
        $region71: #{tpu_custom_call.1} parent=67 // pred_region
          %p771 = scmp.lt.s32.totalorder %s22, 1
          %s772 = scalar_select %p771, %s22, 1
          %s773 = smul.addr %s772, 8
          %s774 = scalar_lea.vmem %s9, %s773
        $region72: #{tpu_custom_call.1} parent=67 // pred_fallthru
          _
      $region68: #{tpu_custom_call.1} parent=5 // pred_fallthru
        _
    $region6: #{tpu_custom_call.1} parent=1 // loop_footer
      %s20 = sadd.s32 1, %s16
    $region7: #{tpu_custom_call.1} parent=1 // loop_footer_branch
      %15 = sbr.rel target = $region3
    $region8: #{tpu_custom_call.1} parent=1 // loop_exit
      _
    %775 = vsyncpa [#allocation3], 1
    %s776 = scalar_lea.sflag [#allocation3], 1
    %777 = vsyncpa %s776, 1

</llo_original>
